<compile_context>
chip_gen: v7x
topology: tpu7x:2x2x1
jax: 0.10.0
libtpu: 0.0.40
codegen_flags: <defaults>
</compile_context>

<pallas_src>
import functools

import numpy as np
import jax
import jax.numpy as jnp
from jax.experimental import pallas as pl
from jax.experimental.pallas import tpu as pltpu

M_PAD = 8     # f32 sublane count; only row 0 of the activation slab is "real"
LANE = 128    # every feature dimension is padded up to a multiple of 128


def _round_up(x, m):
    return ((x + m - 1) // m) * m


def _pick_tile(dim, cap=512):
    """Largest tile in {512, 256, 128} that divides `dim` (dim is a multiple of 128)."""
    for t in (512, 256, 128):
        if t <= cap and dim % t == 0:
            return t
    return dim


def _linear_kernel(x_ref, w_ref, b_ref, o_ref, acc_ref, *, apply_relu):
    """One output-column tile of y = (relu?)(x @ W + b); reduction streamed over K tiles."""
    k = pl.program_id(1)

    @pl.when(k == 0)
    def _():
        acc_ref[...] = jnp.zeros_like(acc_ref)

    # bf16 x bf16 MXU matmul, f32 accumulation.  Weights arrive as bf16 tiles
    # (never up-cast); only the tiny (8, tk) activation tile is cast.
    acc_ref[...] += jnp.dot(
        x_ref[...].astype(jnp.bfloat16),
        w_ref[...],
        preferred_element_type=jnp.float32,
    )

    @pl.when(k == pl.num_programs(1) - 1)
    def _():
        y = acc_ref[...] + b_ref[...]          # f32 epilogue (cheap path on v5e too)
        if apply_relu:
            y = jnp.maximum(y, 0.0)
        o_ref[...] = y.astype(o_ref.dtype)


def _linear_layer(x_pad, w_bf16, b_f32, *, apply_relu):
    """x_pad: (M_PAD, K_pad) f32, w_bf16: (K_pad, N_pad) bf16, b_f32: (1, N_pad) f32."""
    K_pad, N_pad = w_bf16.shape
    assert x_pad.shape == (M_PAD, K_pad)
    tk = _pick_tile(K_pad)
    tn = _pick_tile(N_pad)
    grid = (N_pad // tn, K_pad // tk)          # (output-column tiles, reduction tiles)

    # Per-step VMEM footprint: double-buffered inputs/outputs + accumulator scratch.
    step_bytes = (
        2 * (M_PAD * tk * 4)      # x tile (f32)
        + 2 * (tk * tn * 2)       # W tile (bf16)
        + 2 * (tn * 4)            # bias tile (f32)
        + 2 * (M_PAD * tn * 4)    # output tile (f32)
        + (M_PAD * tn * 4)        # accumulator scratch (f32)
    )
    vmem_limit = min(max(2 * step_bytes + (4 << 20), 16 << 20), 64 << 20)

    cost = pl.CostEstimate(
        flops=2 * M_PAD * K_pad * N_pad,
        transcendentals=0,
        bytes_accessed=(K_pad * N_pad * 2        # weights (bf16) -- dominant term
                        + M_PAD * K_pad * 4
                        + M_PAD * N_pad * 4
                        + N_pad * 4),
    )

    kernel = functools.partial(_linear_kernel, apply_relu=apply_relu)
    return pl.pallas_call(
        kernel,
        out_shape=jax.ShapeDtypeStruct((M_PAD, N_pad), jnp.float32),
        grid_spec=pltpu.PrefetchScalarGridSpec(
            num_scalar_prefetch=0,
            grid=grid,
            in_specs=[
                pl.BlockSpec((M_PAD, tk), lambda j, k: (0, k)),   # activations
                pl.BlockSpec((tk, tn), lambda j, k: (k, j)),      # bf16 weight tile
                pl.BlockSpec((1, tn), lambda j, k: (0, j)),       # bias tile
            ],
            out_specs=pl.BlockSpec((M_PAD, tn), lambda j, k: (0, j)),
            scratch_shapes=[pltpu.VMEM((M_PAD, tn), jnp.float32)],
        ),
        compiler_params=pltpu.CompilerParams(
            dimension_semantics=("parallel", "arbitrary"),
            vmem_limit_bytes=vmem_limit,
        ),
        cost_estimate=cost,
    )(x_pad, w_bf16, b_f32)


def densenet_prepare_params(weights, biases):
    """Pad every (in, out) weight / bias to lane multiples; weights -> bf16, biases -> f32."""
    prepared = []
    for w, b in zip(weights, biases):
        K, N = w.shape
        K_pad, N_pad = _round_up(K, LANE), _round_up(N, LANE)
        w_p = jnp.zeros((K_pad, N_pad), jnp.bfloat16).at[:K, :N].set(
            jnp.asarray(w).astype(jnp.bfloat16))
        b_p = jnp.zeros((1, N_pad), jnp.float32).at[0, :N].set(
            jnp.asarray(b).astype(jnp.float32))
        prepared.append((w_p, b_p, N))
    return prepared


def densenet_forward(x, prepared_params):
    """Mirrors DenseNet.forward: flatten the whole input, then Linear/ReLU stack."""
    x_flat = jnp.reshape(x, (-1,)).astype(jnp.float32)   # torch.flatten(x)
    K = x_flat.shape[0]
    K_pad = _round_up(K, LANE)
    assert prepared_params[0][0].shape[0] == K_pad
    h = jnp.zeros((M_PAD, K_pad), jnp.float32).at[0, :K].set(x_flat)

    n_layers = len(prepared_params)
    for i, (w_p, b_p, _) in enumerate(prepared_params):
        h = _linear_layer(h, w_p, b_p, apply_relu=(i < n_layers - 1))
    out_real = prepared_params[-1][2]
    return h[0, :out_real]                                # 1-D, like the PyTorch module


def init_linear_params(key, in_dim, out_dim):
    """Deterministic init mimicking torch.nn.Linear: U(-1/sqrt(in), 1/sqrt(in)); W stored (in, out)."""
    kw, kb = jax.random.split(key)
    bound = 1.0 / np.sqrt(in_dim)
    w_t = jax.random.uniform(kw, (in_dim, out_dim), jnp.float32, -bound, bound)
    b = jax.random.uniform(kb, (out_dim,), jnp.float32, -bound, bound)
    return w_t, b


def reference_forward_f32(x, weights, biases):
    """Plain-JAX f32 reference (mirrors the PyTorch forward)."""
    h = jnp.reshape(x, (-1,)).astype(jnp.float32)
    n = len(weights)
    for i in range(n):
        h = h @ weights[i] + biases[i]
        if i < n - 1:
            h = jnp.maximum(h, 0.0)
    return h


def reference_forward_bf16(x, weights, biases):
    """Reference matching the kernel's numerics (bf16 operands, f32 accumulation)."""
    h = jnp.reshape(x, (-1,)).astype(jnp.float32)
    n = len(weights)
    for i in range(n):
        y = jnp.dot(h.astype(jnp.bfloat16)[None, :],
                    weights[i].astype(jnp.bfloat16),
                    preferred_element_type=jnp.float32)[0] + biases[i]
        h = jnp.maximum(y, 0.0) if i < n - 1 else y
    return h


if __name__ == "__main__":
    # Small shapes: x of shape (2, 4, 16) -> flatten -> input_size = 128.
    # Middle width 200 and final width 64 deliberately exercise the lane-padding path.
    input_size = 2 * 4 * 16
    layer_sizes = [256, 200, 64]

    key = jax.random.PRNGKey(0)
    kx, *kparams = jax.random.split(key, 1 + len(layer_sizes))

    x = jax.random.normal(kx, (2, 4, 16), dtype=jnp.float32)

    dims = [input_size] + list(layer_sizes)
    weights, biases = [], []
    for i in range(len(layer_sizes)):
        w_t, b = init_linear_params(kparams[i], dims[i], dims[i + 1])
        weights.append(w_t)
        biases.append(b)

    params = densenet_prepare_params(weights, biases)
    out = densenet_forward(x, params)
    out = jax.block_until_ready(out)
    out_np = np.asarray(out)

    # Tight check vs. a reference that uses the same bf16-operand / f32-accumulate math.
    ref_bf16 = np.asarray(reference_forward_bf16(x, weights, biases))
    np.testing.assert_allclose(out_np, ref_bf16, rtol=1e-3, atol=1e-3)

    # Loose check vs. the pure-f32 PyTorch-equivalent reference (bf16 operand rounding).
    ref_f32 = np.asarray(reference_forward_f32(x, weights, biases))
    np.testing.assert_allclose(out_np, ref_f32, rtol=5e-2, atol=5e-2)

    print("KERNEL_OK")
</pallas_src>

<mosaic_0001>
module attributes {stable_mosaic.version = 11 : i64} {
  func.func @_linear_kernel(%arg0: i32, %arg1: i32, %arg2: memref<8x128xf32, #tpu.memory_space<vmem>>, %arg3: memref<128x256xbf16, #tpu.memory_space<vmem>>, %arg4: memref<1x256xf32, #tpu.memory_space<vmem>>, %arg5: memref<8x256xf32, #tpu.memory_space<vmem>>, %arg6: memref<8x256xf32, #tpu.memory_space<vmem>>) attributes {dimension_semantics = [#tpu.dimension_semantics<parallel>, #tpu.dimension_semantics<arbitrary>], iteration_bounds = array<i64: 1, 1>, scalar_prefetch = 0 : i64, scratch_operands = 1 : i64, tpu.core_type = #tpu.core_type<tc>, window_params = [{transform_indices = @transform_0, window_bounds = array<i64: 8, 128>}, {transform_indices = @transform_1, window_bounds = array<i64: 128, 256>}, {transform_indices = @transform_2, window_bounds = array<i64: 1, 256>}, {transform_indices = @transform_3, window_bounds = array<i64: 8, 256>}]} {
    %c0_i32 = arith.constant 0 : i32
    %0 = arith.cmpi eq, %arg1, %c0_i32 : i32
    %1 = arith.extui %0 : i1 to i32
    %c0_i32_0 = arith.constant 0 : i32
    %2 = arith.cmpi ne, %1, %c0_i32_0 : i32
    scf.if %2 {
      %cst_10 = arith.constant 0.000000e+00 : f32
      %13 = vector.broadcast %cst_10 : f32 to vector<8x256xf32>
      %c0_11 = arith.constant 0 : index
      %c0_12 = arith.constant 0 : index
      %14 = vector.load %arg6[%c0_11, %c0_12] : memref<8x256xf32, #tpu.memory_space<vmem>>, vector<8x256xf32>
      tpu.vector_store %arg6[%c0_11, %c0_12], %13 {strides = array<i32>} : memref<8x256xf32, #tpu.memory_space<vmem>>, vector<8x256xf32>,
    } else {
    }
    %c0 = arith.constant 0 : index
    %c0_1 = arith.constant 0 : index
    %3 = vector.load %arg6[%c0, %c0_1] : memref<8x256xf32, #tpu.memory_space<vmem>>, vector<8x256xf32>
    %c0_2 = arith.constant 0 : index
    %c0_3 = arith.constant 0 : index
    %4 = vector.load %arg2[%c0_2, %c0_3] : memref<8x128xf32, #tpu.memory_space<vmem>>, vector<8x128xf32>
    %5 = arith.truncf %4 : vector<8x128xf32> to vector<8x128xbf16>
    %c0_4 = arith.constant 0 : index
    %c0_5 = arith.constant 0 : index
    %6 = vector.load %arg3[%c0_4, %c0_5] : memref<128x256xbf16, #tpu.memory_space<vmem>>, vector<128x256xbf16>
    %cst = arith.constant dense<0.000000e+00> : vector<8x256xf32>
    %7 = tpu.matmul %5, %6, %cst {dimension_numbers = #tpu.dot_dimension_numbers<[1], [0], [0], [1], [0, 0, 1, 1], [], []>} : vector<8x128xbf16>, vector<128x256xbf16>, vector<8x256xf32> -> vector<8x256xf32>
    %8 = arith.addf %3, %7 : vector<8x256xf32>
    %c0_6 = arith.constant 0 : index
    %c0_7 = arith.constant 0 : index
    %9 = vector.load %arg6[%c0_6, %c0_7] : memref<8x256xf32, #tpu.memory_space<vmem>>, vector<8x256xf32>
    tpu.vector_store %arg6[%c0_6, %c0_7], %8 {strides = array<i32>} : memref<8x256xf32, #tpu.memory_space<vmem>>, vector<8x256xf32>,
    %c0_i32_8 = arith.constant 0 : i32
    %10 = arith.cmpi eq, %arg1, %c0_i32_8 : i32
    %11 = arith.extui %10 : i1 to i32
    %c0_i32_9 = arith.constant 0 : i32
    %12 = arith.cmpi ne, %11, %c0_i32_9 : i32
    scf.if %12 {
      %c0_10 = arith.constant 0 : index
      %c0_11 = arith.constant 0 : index
      %13 = vector.load %arg6[%c0_10, %c0_11] : memref<8x256xf32, #tpu.memory_space<vmem>>, vector<8x256xf32>
      %c0_12 = arith.constant 0 : index
      %c0_13 = arith.constant 0 : index
      %14 = vector.load %arg4[%c0_12, %c0_13] : memref<1x256xf32, #tpu.memory_space<vmem>>, vector<1x256xf32>
      %15 = vector.broadcast %14 : vector<1x256xf32> to vector<8x256xf32>
      %16 = arith.addf %13, %15 : vector<8x256xf32>
      %cst_14 = arith.constant 0.000000e+00 : f32
      %17 = vector.broadcast %cst_14 : f32 to vector<8x256xf32>
      %18 = arith.maximumf %16, %17 : vector<8x256xf32>
      %c0_15 = arith.constant 0 : index
      %c0_16 = arith.constant 0 : index
      %19 = vector.load %arg5[%c0_15, %c0_16] : memref<8x256xf32, #tpu.memory_space<vmem>>, vector<8x256xf32>
      tpu.vector_store %arg5[%c0_15, %c0_16], %18 {strides = array<i32>} : memref<8x256xf32, #tpu.memory_space<vmem>>, vector<8x256xf32>,
    } else {
    }
    return
  }
  func.func @transform_0(%arg0: i32, %arg1: i32) -> (i32, i32) {
    %c0_i32 = arith.constant 0 : i32
    %c0_i32_0 = arith.constant 0 : i32
    return %c0_i32, %arg1 : i32, i32
  }
  func.func @transform_1(%arg0: i32, %arg1: i32) -> (i32, i32) {
    %c0_i32 = arith.constant 0 : i32
    return %arg1, %arg0 : i32, i32
  }
  func.func @transform_2(%arg0: i32, %arg1: i32) -> (i32, i32) {
    %c0_i32 = arith.constant 0 : i32
    %c0_i32_0 = arith.constant 0 : i32
    return %c0_i32, %arg0 : i32, i32
  }
  func.func @transform_3(%arg0: i32, %arg1: i32) -> (i32, i32) {
    %c0_i32 = arith.constant 0 : i32
    %c0_i32_0 = arith.constant 0 : i32
    return %c0_i32, %arg0 : i32, i32
  }
}

</mosaic_0001>

<llo_original>
// kernel: tpu_custom_call.1
$region0: #{tpu_custom_call.1}
  #allocation0 [shape = 'u32[]', space=smem, size = 0x4, offset = 0x4, fixed_abs, tag = 'smem constant byte address 0x4 - core index']
  #allocation1 [shape = 'u32[144,128]{1,0:T(1,128)}', space=vmem, size = 0x12000, scoped, tag = 'internal scratch']
  #allocation2 [shape = 'f32[8,256]{1,0:T(8,128)}', space=vmem, size = 0x2000, scoped, tag = 'scratch operand']
  %s0 = inlined_call_operand.hbm [shape: f32[8,128], index: 0, kind: input, shape index: {}]
  %s1 = inlined_call_operand.hbm [shape: bf16[128,256], index: 1, kind: input, shape index: {}]
  %s2 = inlined_call_operand.vmem [shape: f32[1,256], index: 2, kind: input, shape index: {}]
  %s3 = inlined_call_operand.hbm [shape: f32[8,256], index: 3, kind: output, shape index: {}]
  %s4 = sld [smem:[#allocation0]]
  $region38: #{tpu_custom_call.1} parent=0
    _
  %s6 = ssub.s32 1, %s4
  %s7 = scalar_select 0, %s6, %s4
  $region1: #{tpu_custom_call.1} parent=0
    #allocation3 [shape = 'u8[4096]{0}', space=vmem, size = 0x1000, scoped, tag = 'input window, operand 0, single buffered']
    #allocation4 [shape = 's32[1]{0}', space=sflag, size = 0x4, scoped, tag = 'scoped memory for tpu_custom_call.1']
    #allocation5 [shape = 's32[1]{0}', space=sflag, size = 0x4, scoped, tag = 'scoped memory for tpu_custom_call.1']
    #allocation6 [shape = 'u8[65536]{0}', space=vmem, size = 0x10000, scoped, tag = 'input window, operand 1, single buffered']
    #allocation7 [shape = 's32[1]{0}', space=sflag, size = 0x4, scoped, tag = 'scoped memory for tpu_custom_call.1']
    #allocation8 [shape = 'u8[8192]{0}', space=vmem, size = 0x2000, scoped, tag = 'output window, operand 0, single buffered']
    %8 = vsyncpa [#allocation4], 0
    %9 = vsyncpa [#allocation7], 0
    %10 = vsyncpa [#allocation5], 0
    // Predicated region
    $region2: #{tpu_custom_call.1} parent=1 // pred_check
      _
    $region3: #{tpu_custom_call.1} parent=1 // pred_check_branch
      %12 = sbr.rel (0) target = $region5
    $region4: #{tpu_custom_call.1} parent=1 // pred_region
      %s14 = ssub.s32 128, 128
      %15 = vsyncadd [#allocation4], %s14
      %s17 = sshll.u32 [#allocation3], 4
      %s18 = int_to_ptr.vmem [resolvable:$true] %s17
      %20 = dma.hbm_to_vmem [thread:$0]  %s0, 128, %s18, [#allocation4]
    $region5: #{tpu_custom_call.1} parent=1 // pred_fallthru
      _
    // Predicated region
    $region6: #{tpu_custom_call.1} parent=1 // pred_check
      _
    $region7: #{tpu_custom_call.1} parent=1 // pred_check_branch
      %22 = sbr.rel (0) target = $region9
    $region8: #{tpu_custom_call.1} parent=1 // pred_region
      %s24 = ssub.s32 2048, 2048
      %25 = vsyncadd [#allocation7], %s24
      %s26 = sshll.u32 [#allocation6], 4
      %s27 = int_to_ptr.vmem [resolvable:$true] %s26
      %32 = dma.hbm_to_vmem [thread:$0]  %s1, 2048, %s27, [#allocation7], 128, 128, 8
    $region9: #{tpu_custom_call.1} parent=1 // pred_fallthru
      _
    // Predicated region
    $region10: #{tpu_custom_call.1} parent=1 // pred_check
      _
    $region11: #{tpu_custom_call.1} parent=1 // pred_check_branch
      %34 = sbr.rel (0) target = $region13
    $region12: #{tpu_custom_call.1} parent=1 // pred_region
      _
    $region13: #{tpu_custom_call.1} parent=1 // pred_fallthru
      _
    // Predicated region
    $region14: #{tpu_custom_call.1} parent=1 // pred_check
      _
    $region15: #{tpu_custom_call.1} parent=1 // pred_check_branch
      %36 = sbr.rel (0) target = $region17
    $region16: #{tpu_custom_call.1} parent=1 // pred_region
      %37 = dma.done [#allocation4], 128
    $region17: #{tpu_custom_call.1} parent=1 // pred_fallthru
      _
    // Predicated region
    $region18: #{tpu_custom_call.1} parent=1 // pred_check
      _
    $region19: #{tpu_custom_call.1} parent=1 // pred_check_branch
      %39 = sbr.rel (0) target = $region21
    $region20: #{tpu_custom_call.1} parent=1 // pred_region
      %40 = dma.done [#allocation7], 2048
    $region21: #{tpu_custom_call.1} parent=1 // pred_fallthru
      _
    %p42 = scmp.eq.s32.totalorder 0, 0
    // Predicated region
    $region22: #{tpu_custom_call.1} parent=1 // pred_check
      %p43 = pneg %p42
    $region23: #{tpu_custom_call.1} parent=1 // pred_check_branch
      %45 = sbr.rel (%p43) target = $region25
    $region24: #{tpu_custom_call.1} parent=1 // pred_region
      %46 = vst [vmem:[#allocation2] sm:$0xff] 0.0
      %47 = vst [vmem:[#allocation2 + $0x8] sm:$0xff] 0.0
    $region25: #{tpu_custom_call.1} parent=1 // pred_fallthru
      _
    %v48 = vld [vmem:[#allocation2] sm:$0xff]
    %v49 = vld [vmem:[#allocation2 + $0x8] sm:$0xff]
    %v50 = vld [vmem:[#allocation3] sm:$0xff]
    %v51 = vpack.c.bf16 %v50, %v50
    %v52 = vld [vmem:[#allocation6] sm:$0xff]
    %v53 = vld [vmem:[#allocation6 + $0x8] sm:$0xff]
    %v54 = vld [vmem:[#allocation6 + $0x10] sm:$0xff]
    %v55 = vld [vmem:[#allocation6 + $0x18] sm:$0xff]
    %v56 = vld [vmem:[#allocation6 + $0x20] sm:$0xff]
    %v57 = vld [vmem:[#allocation6 + $0x28] sm:$0xff]
    %v58 = vld [vmem:[#allocation6 + $0x30] sm:$0xff]
    %v59 = vld [vmem:[#allocation6 + $0x38] sm:$0xff]
    %v60 = vld [vmem:[#allocation6 + $0x40] sm:$0xff]
    %v61 = vld [vmem:[#allocation6 + $0x48] sm:$0xff]
    %v62 = vld [vmem:[#allocation6 + $0x50] sm:$0xff]
    %v63 = vld [vmem:[#allocation6 + $0x58] sm:$0xff]
    %v64 = vld [vmem:[#allocation6 + $0x60] sm:$0xff]
    %v65 = vld [vmem:[#allocation6 + $0x68] sm:$0xff]
    %v66 = vld [vmem:[#allocation6 + $0x70] sm:$0xff]
    %v67 = vld [vmem:[#allocation6 + $0x78] sm:$0xff]
    %v84 = vunpack.c.l.b16 %v52
    %v85 = vunpack.c.h.b16 %v52
    %v86 = vunpack.c.l.b16 %v53
    %v87 = vunpack.c.h.b16 %v53
    %v88 = vunpack.c.l.b16 %v54
    %v89 = vunpack.c.h.b16 %v54
    %v90 = vunpack.c.l.b16 %v55
    %v91 = vunpack.c.h.b16 %v55
    %v92 = vunpack.c.l.b16 %v56
    %v93 = vunpack.c.h.b16 %v56
    %v94 = vunpack.c.l.b16 %v57
    %v95 = vunpack.c.h.b16 %v57
    %v96 = vunpack.c.l.b16 %v58
    %v97 = vunpack.c.h.b16 %v58
    %v98 = vunpack.c.l.b16 %v59
    %v99 = vunpack.c.h.b16 %v59
    %v100 = vunpack.c.l.b16 %v60
    %v101 = vunpack.c.h.b16 %v60
    %v102 = vunpack.c.l.b16 %v61
    %v103 = vunpack.c.h.b16 %v61
    %v104 = vunpack.c.l.b16 %v62
    %v105 = vunpack.c.h.b16 %v62
    %v106 = vunpack.c.l.b16 %v63
    %v107 = vunpack.c.h.b16 %v63
    %v108 = vunpack.c.l.b16 %v64
    %v109 = vunpack.c.h.b16 %v64
    %v110 = vunpack.c.l.b16 %v65
    %v111 = vunpack.c.h.b16 %v65
    %v112 = vunpack.c.l.b16 %v66
    %v113 = vunpack.c.h.b16 %v66
    %v114 = vunpack.c.l.b16 %v67
    %v115 = vunpack.c.h.b16 %v67
    %v116 = vpack.c.b16 %v86, %v84
    %v117 = vpack.c.b16 %v87, %v85
    %v118 = vpack.c.b16 %v90, %v88
    %v119 = vpack.c.b16 %v91, %v89
    %v120 = vpack.c.b16 %v94, %v92
    %v121 = vpack.c.b16 %v95, %v93
    %v122 = vpack.c.b16 %v98, %v96
    %v123 = vpack.c.b16 %v99, %v97
    %v124 = vpack.c.b16 %v102, %v100
    %v125 = vpack.c.b16 %v103, %v101
    %v126 = vpack.c.b16 %v106, %v104
    %v127 = vpack.c.b16 %v107, %v105
    %v128 = vpack.c.b16 %v110, %v108
    %v129 = vpack.c.b16 %v111, %v109
    %v130 = vpack.c.b16 %v114, %v112
    %v131 = vpack.c.b16 %v115, %v113
    %148 = vmatprep.subr.bf16.mxu0 %v117
    %149 = vmatpush1.bf16.msra.mxu0 %v116
    %150 = vmatprep.subr.bf16.mxu0 %v119
    %151 = vmatpush1.bf16.msra.mxu0 %v118
    %152 = vmatprep.subr.bf16.mxu0 %v121
    %153 = vmatpush1.bf16.msra.mxu0 %v120
    %154 = vmatprep.subr.bf16.mxu0 %v123
    %155 = vmatpush1.bf16.msra.mxu0 %v122
    %156 = vmatprep.subr.bf16.mxu0 %v125
    %157 = vmatpush1.bf16.msra.mxu0 %v124
    %158 = vmatprep.subr.bf16.mxu0 %v127
    %159 = vmatpush1.bf16.msra.mxu0 %v126
    %160 = vmatprep.subr.bf16.mxu0 %v129
    %161 = vmatpush1.bf16.msra.mxu0 %v128
    %162 = vmatprep.subr.bf16.mxu0 %v131
    %163 = vmatpush1.bf16.msra.mxu0 %v130
    %164 = vmatprep.subr.bf16.mxu0 0
    %165 = vmatpush1.bf16.msra.mxu0 0
    %166 = vmatprep.subr.bf16.mxu0 0
    %167 = vmatpush1.bf16.msra.mxu0 0
    %168 = vmatprep.subr.bf16.mxu0 0
    %169 = vmatpush1.bf16.msra.mxu0 0
    %170 = vmatprep.subr.bf16.mxu0 0
    %171 = vmatpush1.bf16.msra.mxu0 0
    %172 = vmatprep.subr.bf16.mxu0 0
    %173 = vmatpush1.bf16.msra.mxu0 0
    %174 = vmatprep.subr.bf16.mxu0 0
    %175 = vmatpush1.bf16.msra.mxu0 0
    %176 = vmatprep.subr.bf16.mxu0 0
    %177 = vmatpush1.bf16.msra.mxu0 0
    %178 = vmatprep.subr.bf16.mxu0 0
    %179 = vmatpush1.bf16.msra.mxu0 0
    %180 = vmatprep.mubr.bf16.mxu0 0
    %181 = vmatmul.mubr.bf16.gmra.mrb[0].mxu0 %v51
    %v182 = vpop.f32.mrb[0].mxu0
    %v183 = vadd.f32 0.0, %v182
    %v184 = vpop.f32.mrb[0].mxu0
    %v185 = vadd.f32 0.0, %v184
    %v186 = vpop.f32.mrb[0].mxu0
    %v187 = vpop.f32.mrb[0].mxu0
    %188 = vdwg.mxu0
    %v189 = vadd.f32 %v48, %v183
    %v190 = vadd.f32 %v49, %v185
    %191 = vst [vmem:[#allocation2] sm:$0xff] %v189
    %192 = vst [vmem:[#allocation2 + $0x8] sm:$0xff] %v190
    // Predicated region
    $region26: #{tpu_custom_call.1} parent=1 // pred_check
      %p193 = pneg %p42
    $region27: #{tpu_custom_call.1} parent=1 // pred_check_branch
      %195 = sbr.rel (%p193) target = $region29
    $region28: #{tpu_custom_call.1} parent=1 // pred_region
      %v196 = vld [vmem:[#allocation2] sm:$0xff]
      %v197 = vld [vmem:[#allocation2 + $0x8] sm:$0xff]
      %v198 = vld [vmem:[%s2] sm:$0x3]
      %v200 = vlaneseq
      %v201 = vshrl.u32 %v200, 7
      %v202 = vsub.s32 0, %v201
      %v203 = vrot.slane %v198, %v202
      %v204 = vlaneseq
      %v205 = vshrl.u32 %v204, 7
      %v206 = vsub.s32 1, %v205
      %v207 = vrot.slane %v198, %v206
      %v210 = vadd.f32 %v196, %v203
      %v211 = vadd.f32 %v197, %v207
      %v212 = vmax.f32 %v210, 0.0
      %v213 = vmax.f32 %v211, 0.0
      %214 = vst [vmem:[#allocation8] sm:$0xff] %v212
      %215 = vst [vmem:[#allocation8 + $0x8] sm:$0xff] %v213
    $region29: #{tpu_custom_call.1} parent=1 // pred_fallthru
      _
    // Predicated region
    $region30: #{tpu_custom_call.1} parent=1 // pred_check
      _
    $region31: #{tpu_custom_call.1} parent=1 // pred_check_branch
      %217 = sbr.rel (0) target = $region33
    $region32: #{tpu_custom_call.1} parent=1 // pred_region
      %s219 = ssub.s32 256, 256
      %220 = vsyncadd [#allocation5], %s219
      %s222 = sshll.u32 [#allocation8], 4
      %s223 = int_to_ptr.vmem [resolvable:$true] %s222
      %225 = dma.vmem_to_hbm [thread:$0]  %s223, 256, %s3, [#allocation5]
    $region33: #{tpu_custom_call.1} parent=1 // pred_fallthru
      _
    // Predicated region
    $region34: #{tpu_custom_call.1} parent=1 // pred_check
      _
    $region35: #{tpu_custom_call.1} parent=1 // pred_check_branch
      %227 = sbr.rel (0) target = $region37
    $region36: #{tpu_custom_call.1} parent=1 // pred_region
      %228 = dma.done [#allocation5], 256
    $region37: #{tpu_custom_call.1} parent=1 // pred_fallthru
      _
    %229 = vsyncpa [#allocation4], 1
    %230 = vsyncpa [#allocation7], 1
    %231 = vsyncpa [#allocation5], 1

</llo_original>
